<compile_context>
chip_gen: v6e
topology: v6e:2x2x1
jax: 0.10.0
libtpu: 0.0.40
codegen_flags: <defaults>
</compile_context>

<pallas_src>
import functools

import jax
import jax.numpy as jnp
import numpy as np
from jax.experimental import pallas as pl
from jax.experimental.pallas import tpu as pltpu


def _setconv_kernel(xt_ref, xc_ref, zc_ref, *rest, has_zt, use_scratch,
                    exp_dtype):
    """Grid = (batch, nt tiles, nc tiles); the last (nc) axis is the reduction."""
    if use_scratch:
        if has_zt:
            zt_ref, out_ref, acc_ref = rest
        else:
            zt_ref = None
            out_ref, acc_ref = rest
    else:
        if has_zt:
            zt_ref, out_ref = rest
        else:
            zt_ref = None
            (out_ref,) = rest
        acc_ref = None

    k = pl.program_id(2)
    nk = pl.num_programs(2)

    # Entire exp argument in one f32 MXU matmul over the augmented coords:
    #   neg_dist[i, j] = a_i . b_j - 0.5||a_i||^2 - 0.5||b_j||^2
    neg_dist = jnp.dot(xt_ref[0], xc_ref[0],
                       preferred_element_type=jnp.float32)     # (tq, tk) f32

    # exp in bf16 where the EUP supports it (v6e / v7x); f32 otherwise.
    w = jnp.exp(neg_dist.astype(exp_dtype)).astype(jnp.bfloat16)

    # Kernel-weighted sum of context values (bf16 MXU, f32 accumulation).
    upd = jnp.dot(w, zc_ref[0], preferred_element_type=jnp.float32)

    if use_scratch:
        @pl.when(k == 0)
        def _():
            if has_zt:
                acc_ref[...] = zt_ref[0].astype(jnp.float32)
            else:
                acc_ref[...] = jnp.zeros_like(acc_ref)

        acc_ref[...] += upd

        @pl.when(k == nk - 1)
        def _():
            out_ref[0] = acc_ref[...].astype(out_ref.dtype)
    else:
        # f32 output: accumulate straight into the VMEM-resident output block.
        @pl.when(k == 0)
        def _():
            if has_zt:
                out_ref[0] = zt_ref[0].astype(jnp.float32)
            else:
                out_ref[0] = jnp.zeros(out_ref.shape[1:], out_ref.dtype)

        out_ref[0] += upd


def _round_up(n, a):
    return ((n + a - 1) // a) * a


def _exp_dtype_for_device():
    try:
        kind = jax.devices()[0].device_kind.lower()
    except Exception:  # pragma: no cover
        return jnp.float32
    if "v6" in kind or "v7" in kind:
        return jnp.bfloat16      # bf16 EUP: ~2x exp throughput, feeds MXU directly
    return jnp.float32           # v5e and older: no bf16 EUP


def _vmem_estimate(tq, tk, dz, has_zt, zt_bytes, out_bytes, use_scratch):
    b = 2 * tq * 128 * 4            # xt_aug block (K lanes pad to 128), 2 bufs
    b += 2 * 8 * tk * 4             # xc_aug_t block
    b += 2 * tk * dz * 2            # zc (bf16)
    if has_zt:
        b += 2 * tq * dz * zt_bytes
    b += 2 * tq * dz * out_bytes
    if use_scratch:
        b += tq * dz * 4
    b += 4 * tq * tk * 4            # live (tq, tk) temporaries (generous)
    return b


def setconv_grid_decoder(xc, zc, xt, zt=None, *, init_lengthscale=0.1,
                         tq=None, tk=None):
    """JAX/Pallas equivalent of SetConvGridDecoder.forward (top_k_ctot=None)."""
    m, dx = xc.shape[0], xc.shape[-1]
    dz = zc.shape[-1]

    # flatten_grid: [m, ..., d] -> [m, n, d]   (plain-JAX glue)
    xc_flat = xc.reshape(m, -1, dx).astype(jnp.float32)
    zc_flat = zc.reshape(m, -1, dz)
    nc = xc_flat.shape[1]
    nt = xt.shape[1]

    # BaseSetConv parameter init:  ls = 1e-5 + softplus(log(exp(init) - 1)).
    ls_param = jnp.log(jnp.exp(jnp.full((dx,), init_lengthscale, jnp.float32))
                       - 1.0)
    lengthscale = 1e-5 + jax.nn.softplus(ls_param)
    inv_ls = (1.0 / lengthscale).astype(jnp.float32)

    # Augmented coordinates: with a = xt/ls, b = xc/ls,
    #   -0.5*||a - b||^2 = a.b - 0.5||a||^2 - 0.5||b||^2
    # so  [a, -0.5||a||^2, 1] . [b, 1, -0.5||b||^2]  is exactly the exp
    # argument and the whole distance computation becomes one MXU matmul.
    xt_s = xt.astype(jnp.float32) * inv_ls                        # (m, nt, dx)
    xc_s = xc_flat * inv_ls                                       # (m, nc, dx)
    q_half = 0.5 * jnp.sum(xt_s * xt_s, axis=-1, keepdims=True)   # (m, nt, 1)
    c_half = 0.5 * jnp.sum(xc_s * xc_s, axis=-1, keepdims=True)   # (m, nc, 1)
    k_raw = dx + 2
    k_pad = _round_up(k_raw, 8)       # pad contraction dim to a full sublane tile
    xt_aug = jnp.concatenate(
        [xt_s, -q_half, jnp.ones_like(q_half),
         jnp.zeros((m, nt, k_pad - k_raw), jnp.float32)], axis=-1)
    xc_aug = jnp.concatenate(
        [xc_s, jnp.ones_like(c_half), -c_half,
         jnp.zeros((m, nc, k_pad - k_raw), jnp.float32)], axis=-1)
    xc_aug_t = jnp.transpose(xc_aug, (0, 2, 1))                   # (m, k_pad, nc)

    # Context values in bf16 (once, wrapper-side).
    zc_b = zc_flat.astype(jnp.bfloat16)

    has_zt = zt is not None
    out_dtype = jnp.result_type(zc.dtype, zt.dtype) if has_zt else zc.dtype
    use_scratch = jnp.dtype(out_dtype) != jnp.dtype(jnp.float32)
    zt_bytes = jnp.dtype(zt.dtype).itemsize if has_zt else 0
    out_bytes = jnp.dtype(out_dtype).itemsize

    # ---- tile selection (budgeted; ragged axes are padded, never full-size) ----
    if tq is None:
        tq = min(256, _round_up(nt, 8))
    else:
        tq = min(_round_up(tq, 8), _round_up(nt, 8))
    if tk is None:
        tk = min(1024, _round_up(nc, 128))
    else:
        tk = min(_round_up(tk, 128), _round_up(nc, 128))

    budget = 10 * 1024 * 1024   # fits v5e's 16 MiB scoped-VMEM default
    while (_vmem_estimate(tq, tk, dz, has_zt, zt_bytes, out_bytes, use_scratch)
           > budget and tk > 128):
        tk = max(128, (tk // 2 // 128) * 128)
    while (_vmem_estimate(tq, tk, dz, has_zt, zt_bytes, out_bytes, use_scratch)
           > budget and tq > 8):
        tq = max(8, _round_up(tq // 2, 8))

    # Megacore balance (v7x: 2 TensorCores share the parallel grid axes).
    while m * ((nt + tq - 1) // tq) < 2 and tq > 8:
        tq = max(8, _round_up(tq // 2, 8))

    nt_pad = _round_up(nt, tq)
    nc_pad = _round_up(nc, tk)

    if nt_pad != nt:
        pad_t = ((0, 0), (0, nt_pad - nt), (0, 0))
        xt_aug = jnp.pad(xt_aug, pad_t)
        if has_zt:
            zt = jnp.pad(zt, pad_t)
    if nc_pad != nc:
        xc_aug_t = jnp.pad(xc_aug_t, ((0, 0), (0, 0), (0, nc_pad - nc)))
        zc_b = jnp.pad(zc_b, ((0, 0), (0, nc_pad - nc), (0, 0)))  # zero rows -> 0 contribution

    grid = (m, nt_pad // tq, nc_pad // tk)

    in_specs = [
        pl.BlockSpec((1, tq, k_pad), lambda b, i, k: (b, i, 0)),    # xt_aug
        pl.BlockSpec((1, k_pad, tk), lambda b, i, k: (b, 0, k)),    # xc_aug_t
        pl.BlockSpec((1, tk, dz), lambda b, i, k: (b, k, 0)),       # zc (bf16)
    ]
    operands = [xt_aug, xc_aug_t, zc_b]
    if has_zt:
        in_specs.append(pl.BlockSpec((1, tq, dz), lambda b, i, k: (b, i, 0)))
        operands.append(zt)

    scratch_shapes = [pltpu.VMEM((tq, dz), jnp.float32)] if use_scratch else []

    kernel = functools.partial(_setconv_kernel, has_zt=has_zt,
                               use_scratch=use_scratch,
                               exp_dtype=_exp_dtype_for_device())

    out = pl.pallas_call(
        kernel,
        out_shape=jax.ShapeDtypeStruct((m, nt_pad, dz), out_dtype),
        grid_spec=pltpu.PrefetchScalarGridSpec(
            num_scalar_prefetch=0,
            grid=grid,
            in_specs=in_specs,
            out_specs=pl.BlockSpec((1, tq, dz), lambda b, i, k: (b, i, 0)),
            scratch_shapes=scratch_shapes,
        ),
        compiler_params=pltpu.CompilerParams(
            dimension_semantics=("parallel", "parallel", "arbitrary")),
    )(*operands)
    return out[:, :nt]


def _reference(xc, zc, xt, zt, init_lengthscale=0.1):
    """Pure-JAX (f32) reference of the PyTorch forward (top_k_ctot=None)."""
    m, dx = xc.shape[0], xc.shape[-1]
    dz = zc.shape[-1]
    xc_flat = xc.reshape(m, -1, dx).astype(jnp.float32)
    zc_flat = zc.reshape(m, -1, dz).astype(jnp.float32)
    xt = xt.astype(jnp.float32)
    ls_param = jnp.log(jnp.exp(jnp.full((dx,), init_lengthscale, jnp.float32))
                       - 1.0)
    lengthscale = 1e-5 + jax.nn.softplus(ls_param)
    d2 = (xt[:, :, None, :] - xc_flat[:, None, :, :]) ** 2       # [m,nt,nc,dx]
    pre = jnp.sum(d2 / lengthscale ** 2, axis=-1)                 # [m,nt,nc]
    w = jnp.exp(-0.5 * pre)
    upd = jnp.einsum("bnc,bcd->bnd", w, zc_flat)
    return upd if zt is None else zt.astype(jnp.float32) + upd


if __name__ == "__main__":
    key = jax.random.PRNGKey(0)
    keys = jax.random.split(key, 10)

    # --- Test 1: zt provided; nc=64 zero-padded to one 128-wide context tile --
    m, H, W, dx, dz, nt = 2, 8, 8, 2, 32, 16
    xc = jax.random.uniform(keys[0], (m, H, W, dx), jnp.float32)
    zc = jax.random.normal(keys[1], (m, H, W, dz), jnp.float32)
    xt = jax.random.uniform(keys[2], (m, nt, dx), jnp.float32)
    zt = jax.random.normal(keys[3], (m, nt, dz), jnp.float32)
    out = jax.block_until_ready(setconv_grid_decoder(xc, zc, xt, zt))
    np.testing.assert_allclose(np.asarray(out.astype(jnp.float32)),
                               np.asarray(_reference(xc, zc, xt, zt)),
                               rtol=5e-2, atol=5e-2)

    # --- Test 2: zt=None, real multi-tile k reduction -------------------------
    m2, H2, W2, nt2 = 2, 16, 16, 256
    xc2 = jax.random.uniform(keys[4], (m2, H2, W2, dx), jnp.float32)
    zc2 = jax.random.normal(keys[5], (m2, H2, W2, dz), jnp.float32)
    xt2 = jax.random.uniform(keys[6], (m2, nt2, dx), jnp.float32)
    out2 = jax.block_until_ready(
        setconv_grid_decoder(xc2, zc2, xt2, None, tq=128, tk=128))
    np.testing.assert_allclose(np.asarray(out2.astype(jnp.float32)),
                               np.asarray(_reference(xc2, zc2, xt2, None)),
                               rtol=5e-2, atol=5e-2)

    # --- Test 3: ragged nt/nc (pad + slice), bf16 zc -> scratch-accumulator ---
    m3, H3, W3, nt3 = 1, 7, 7, 50
    xc3 = jax.random.uniform(keys[7], (m3, H3, W3, dx), jnp.float32)
    zc3 = jax.random.normal(keys[8], (m3, H3, W3, dz),
                            jnp.float32).astype(jnp.bfloat16)
    xt3 = jax.random.uniform(keys[9], (m3, nt3, dx), jnp.float32)
    out3 = jax.block_until_ready(setconv_grid_decoder(xc3, zc3, xt3, None))
    np.testing.assert_allclose(np.asarray(out3.astype(jnp.float32)),
                               np.asarray(_reference(xc3, zc3, xt3, None)),
                               rtol=5e-2, atol=5e-2)

    print("KERNEL_OK")
</pallas_src>

<mosaic_0001>
module attributes {stable_mosaic.version = 11 : i64} {
  func.func @_setconv_kernel(%arg0: i32, %arg1: i32, %arg2: i32, %arg3: memref<1x16x8xf32, #tpu.memory_space<vmem>>, %arg4: memref<1x8x128xf32, #tpu.memory_space<vmem>>, %arg5: memref<1x128x32xbf16, #tpu.memory_space<vmem>>, %arg6: memref<1x16x32xf32, #tpu.memory_space<vmem>>, %arg7: memref<1x16x32xf32, #tpu.memory_space<vmem>>) attributes {dimension_semantics = [#tpu.dimension_semantics<parallel>, #tpu.dimension_semantics<parallel>, #tpu.dimension_semantics<arbitrary>], iteration_bounds = array<i64: 2, 1, 1>, scalar_prefetch = 0 : i64, scratch_operands = 0 : i64, tpu.core_type = #tpu.core_type<tc>, window_params = [{transform_indices = @transform_0, window_bounds = array<i64: 1, 16, 8>}, {transform_indices = @transform_1, window_bounds = array<i64: 1, 8, 128>}, {transform_indices = @transform_2, window_bounds = array<i64: 1, 128, 32>}, {transform_indices = @transform_3, window_bounds = array<i64: 1, 16, 32>}, {transform_indices = @transform_4, window_bounds = array<i64: 1, 16, 32>}]} {
    %c0 = arith.constant 0 : index
    %c0_0 = arith.constant 0 : index
    %c0_1 = arith.constant 0 : index
    %0 = vector.load %arg3[%c0, %c0_0, %c0_1] : memref<1x16x8xf32, #tpu.memory_space<vmem>>, vector<1x16x8xf32>
    %1 = vector.shape_cast %0 : vector<1x16x8xf32> to vector<16x8xf32>
    %c0_2 = arith.constant 0 : index
    %c0_3 = arith.constant 0 : index
    %c0_4 = arith.constant 0 : index
    %2 = vector.load %arg4[%c0_2, %c0_3, %c0_4] : memref<1x8x128xf32, #tpu.memory_space<vmem>>, vector<1x8x128xf32>
    %3 = vector.shape_cast %2 : vector<1x8x128xf32> to vector<8x128xf32>
    %cst = arith.constant dense<0.000000e+00> : vector<16x128xf32>
    %4 = tpu.matmul %1, %3, %cst {dimension_numbers = #tpu.dot_dimension_numbers<[1], [0], [0], [1], [0, 0, 1, 1], [], []>} : vector<16x8xf32>, vector<8x128xf32>, vector<16x128xf32> -> vector<16x128xf32>
    %5 = math.exp %4 : vector<16x128xf32>
    %6 = arith.truncf %5 : vector<16x128xf32> to vector<16x128xbf16>
    %c0_5 = arith.constant 0 : index
    %c0_6 = arith.constant 0 : index
    %c0_7 = arith.constant 0 : index
    %7 = vector.load %arg5[%c0_5, %c0_6, %c0_7] : memref<1x128x32xbf16, #tpu.memory_space<vmem>>, vector<1x128x32xbf16>
    %8 = vector.shape_cast %7 : vector<1x128x32xbf16> to vector<128x32xbf16>
    %cst_8 = arith.constant dense<0.000000e+00> : vector<16x32xf32>
    %9 = tpu.matmul %6, %8, %cst_8 {dimension_numbers = #tpu.dot_dimension_numbers<[1], [0], [0], [1], [0, 0, 1, 1], [], []>} : vector<16x128xbf16>, vector<128x32xbf16>, vector<16x32xf32> -> vector<16x32xf32>
    %c0_i32 = arith.constant 0 : i32
    %10 = arith.cmpi eq, %arg2, %c0_i32 : i32
    %11 = arith.extui %10 : i1 to i32
    %c0_i32_9 = arith.constant 0 : i32
    %12 = arith.cmpi ne, %11, %c0_i32_9 : i32
    scf.if %12 {
      %c0_16 = arith.constant 0 : index
      %c0_17 = arith.constant 0 : index
      %c0_18 = arith.constant 0 : index
      %19 = vector.load %arg6[%c0_16, %c0_17, %c0_18] : memref<1x16x32xf32, #tpu.memory_space<vmem>>, vector<1x16x32xf32>
      %20 = vector.shape_cast %19 : vector<1x16x32xf32> to vector<16x32xf32>
      %c0_19 = arith.constant 0 : index
      %c0_20 = arith.constant 0 : index
      %c0_21 = arith.constant 0 : index
      %21 = vector.load %arg7[%c0_19, %c0_20, %c0_21] : memref<1x16x32xf32, #tpu.memory_space<vmem>>, vector<1x16x32xf32>
      %22 = vector.shape_cast %21 : vector<1x16x32xf32> to vector<16x32xf32>
      %23 = vector.shape_cast %20 : vector<16x32xf32> to vector<1x16x32xf32>
      tpu.vector_store %arg7[%c0_19, %c0_20, %c0_21], %23 {strides = array<i32>} : memref<1x16x32xf32, #tpu.memory_space<vmem>>, vector<1x16x32xf32>,
    } else {
    }
    %c0_10 = arith.constant 0 : index
    %c0_11 = arith.constant 0 : index
    %c0_12 = arith.constant 0 : index
    %13 = vector.load %arg7[%c0_10, %c0_11, %c0_12] : memref<1x16x32xf32, #tpu.memory_space<vmem>>, vector<1x16x32xf32>
    %14 = vector.shape_cast %13 : vector<1x16x32xf32> to vector<16x32xf32>
    %15 = arith.addf %14, %9 : vector<16x32xf32>
    %c0_13 = arith.constant 0 : index
    %c0_14 = arith.constant 0 : index
    %c0_15 = arith.constant 0 : index
    %16 = vector.load %arg7[%c0_13, %c0_14, %c0_15] : memref<1x16x32xf32, #tpu.memory_space<vmem>>, vector<1x16x32xf32>
    %17 = vector.shape_cast %16 : vector<1x16x32xf32> to vector<16x32xf32>
    %18 = vector.shape_cast %15 : vector<16x32xf32> to vector<1x16x32xf32>
    tpu.vector_store %arg7[%c0_13, %c0_14, %c0_15], %18 {strides = array<i32>} : memref<1x16x32xf32, #tpu.memory_space<vmem>>, vector<1x16x32xf32>,
    return
  }
  func.func @transform_0(%arg0: i32, %arg1: i32, %arg2: i32) -> (i32, i32, i32) {
    %c0_i32 = arith.constant 0 : i32
    %c0_i32_0 = arith.constant 0 : i32
    return %arg0, %arg1, %c0_i32 : i32, i32, i32
  }
  func.func @transform_1(%arg0: i32, %arg1: i32, %arg2: i32) -> (i32, i32, i32) {
    %c0_i32 = arith.constant 0 : i32
    %c0_i32_0 = arith.constant 0 : i32
    return %arg0, %c0_i32, %arg2 : i32, i32, i32
  }
  func.func @transform_2(%arg0: i32, %arg1: i32, %arg2: i32) -> (i32, i32, i32) {
    %c0_i32 = arith.constant 0 : i32
    %c0_i32_0 = arith.constant 0 : i32
    return %arg0, %arg2, %c0_i32 : i32, i32, i32
  }
  func.func @transform_3(%arg0: i32, %arg1: i32, %arg2: i32) -> (i32, i32, i32) {
    %c0_i32 = arith.constant 0 : i32
    %c0_i32_0 = arith.constant 0 : i32
    return %arg0, %arg1, %c0_i32 : i32, i32, i32
  }
  func.func @transform_4(%arg0: i32, %arg1: i32, %arg2: i32) -> (i32, i32, i32) {
    %c0_i32 = arith.constant 0 : i32
    %c0_i32_0 = arith.constant 0 : i32
    return %arg0, %arg1, %c0_i32 : i32, i32, i32
  }
}

</mosaic_0001>

<llo_original>
// kernel: tpu_custom_call.1
$region0: #{tpu_custom_call.1}
  #allocation0 [shape = 'u32[]', space=smem, size = 0x4, offset = 0x4, fixed_abs, tag = 'smem constant byte address 0x4 - core index']
  #allocation1 [shape = 'u32[144,128]{1,0:T(1,128)}', space=vmem, size = 0x12000, scoped, tag = 'internal scratch']
  %s0 = inlined_call_operand.vmem [shape: f32[2,16,8], index: 0, kind: input, shape index: {}]
  %s1 = inlined_call_operand.vmem [shape: f32[2,8,128], index: 1, kind: input, shape index: {}]
  %s2 = inlined_call_operand.vmem [shape: bf16[2,128,32], index: 2, kind: input, shape index: {}]
  %s3 = inlined_call_operand.vmem [shape: f32[2,16,32], index: 3, kind: input, shape index: {}]
  %s4 = inlined_call_operand.hbm [shape: f32[2,16,32], index: 4, kind: output, shape index: {}]
  %s5 = sld [smem:[#allocation0]]
  $region53: #{tpu_custom_call.1} parent=0
    _
  %s7 = ssub.s32 1, %s5
  %s8 = scalar_select 0, %s7, %s5
  $region1: #{tpu_custom_call.1} parent=0
    #allocation2 [shape = 'u8[16384]{0}', space=vmem, size = 0x4000, scoped, tag = 'output window, operand 0']
    #allocation3 [shape = 's32[2]{0}', space=sflag, size = 0x8, scoped, tag = 'scoped memory for tpu_custom_call.1']
    %9 = vsyncpa [#allocation3], 0
    %s10 = scalar_lea.sflag [#allocation3], 1
    %11 = vsyncpa %s10, 0
    loop: start=0, step=1, limit=4
    $region2: #{tpu_custom_call.1} parent=1 // loop_pre_header
      _
    $region3: #{tpu_custom_call.1} parent=1 // loop_header
      %s13 = sphi 0, %s17
      %p14 = scmp.ge.s32.totalorder %s13, 4
      %s20 = sphi 0, %s39
      %s21 = sphi 0, %s35
      %s22 = sphi 0, %s31
      %s23 = sphi 0, %s20
      %s24 = sphi 0, %s21
      %s25 = sphi 0, %s22
      %s26 = sphi 0, %s23
      %s27 = sphi 0, %s24
      %s28 = sphi 0, %s25
      %s44 = sphi 0, %s46
      %s47 = sphi 0, %s44
      %s48 = sphi 0, %s47
      %s64 = sphi 0, %s48
      %s72 = sphi 0, %s74
      %s75 = sphi 0, %s72
      %s76 = sphi 0, %s75
      %s92 = sphi 0, %s76
      %s100 = sphi 0, %s102
      %s103 = sphi 0, %s100
      %s104 = sphi 0, %s103
      %s120 = sphi 0, %s104
      %s128 = sphi 0, %s130
      %s131 = sphi 0, %s128
      %s132 = sphi 0, %s131
      %s148 = sphi 0, %s132
      %s156 = sphi 0, %s158
      %s159 = sphi 0, %s156
      %s160 = sphi 0, %s159
      %s176 = sphi 0, %s160
    $region4: #{tpu_custom_call.1} parent=1 // loop_header_branch
      %16 = sbr.rel (%p14) target = $region8
    $region5: #{tpu_custom_call.1} parent=1 // loop_body
      %s18 = ssub.s32 %s13, 1
      %s19 = ssub.s32 %s13, 2
      %s29 = sadd.s32 1, %s22
      %p30 = scmp.ge.s32.totalorder %s29, 1
      %s31 = scalar_select %p30, 0, %s29
      %s32 = sadd.s32 1, %s21
      %s33 = scalar_select %p30, %s32, %s21
      %p34 = scmp.ge.s32.totalorder %s33, 1
      %s35 = scalar_select %p34, 0, %s33
      %s36 = sadd.s32 1, %s20
      %s37 = scalar_select %p34, %s36, %s20
      %p38 = scmp.ge.s32.totalorder %s37, 2
      %s39 = scalar_select %p38, 0, %s37
      %s40 = ssub.s32 %s20, %s39
      %s41 = ssub.s32 %s21, %s35
      %s42 = sor.u32 %s40, %s41
      %p43 = scmp.eq.s32.totalorder %s42, 0
      %s45 = sadd.s32 %s44, 1
      %s46 = scalar_select %p43, %s44, %s45
      %p49 = pneg %p43
      %p50 = scmp.eq.s32.totalorder %s13, 1
      %p51 = por %p49, %p50
      %p52 = scmp.ne.s32.totalorder %s44, %s47
      %p53 = scmp.eq.s32.totalorder %s13, 0
      %p54 = por %p52, %p53
      %p55 = scmp.ne.s32.totalorder %s44, %s47
      %p56 = scmp.eq.s32.totalorder %s18, 1
      %p57 = por %p55, %p56
      %p58 = scmp.ne.s32.totalorder %s47, %s48
      %p59 = scmp.eq.s32.totalorder %s18, 0
      %p60 = por %p58, %p59
      %p61 = scmp.ne.s32.totalorder %s47, %s48
      %p62 = scmp.eq.s32.totalorder %s19, 1
      %p63 = por %p61, %p62
      %p65 = scmp.ne.s32.totalorder %s48, %s64
      %p66 = scmp.eq.s32.totalorder %s19, 0
      %p67 = por %p65, %p66
      %s68 = ssub.s32 %s20, %s39
      %s69 = ssub.s32 %s22, %s31
      %s70 = sor.u32 %s68, %s69
      %p71 = scmp.eq.s32.totalorder %s70, 0
      %s73 = sadd.s32 %s72, 1
      %s74 = scalar_select %p71, %s72, %s73
      %p77 = pneg %p71
      %p78 = scmp.eq.s32.totalorder %s13, 1
      %p79 = por %p77, %p78
      %p80 = scmp.ne.s32.totalorder %s72, %s75
      %p81 = scmp.eq.s32.totalorder %s13, 0
      %p82 = por %p80, %p81
      %p83 = scmp.ne.s32.totalorder %s72, %s75
      %p84 = scmp.eq.s32.totalorder %s18, 1
      %p85 = por %p83, %p84
      %p86 = scmp.ne.s32.totalorder %s75, %s76
      %p87 = scmp.eq.s32.totalorder %s18, 0
      %p88 = por %p86, %p87
      %p89 = scmp.ne.s32.totalorder %s75, %s76
      %p90 = scmp.eq.s32.totalorder %s19, 1
      %p91 = por %p89, %p90
      %p93 = scmp.ne.s32.totalorder %s76, %s92
      %p94 = scmp.eq.s32.totalorder %s19, 0
      %p95 = por %p93, %p94
      %s96 = ssub.s32 %s20, %s39
      %s97 = ssub.s32 %s22, %s31
      %s98 = sor.u32 %s96, %s97
      %p99 = scmp.eq.s32.totalorder %s98, 0
      %s101 = sadd.s32 %s100, 1
      %s102 = scalar_select %p99, %s100, %s101
      %p105 = pneg %p99
      %p106 = scmp.eq.s32.totalorder %s13, 1
      %p107 = por %p105, %p106
      %p108 = scmp.ne.s32.totalorder %s100, %s103
      %p109 = scmp.eq.s32.totalorder %s13, 0
      %p110 = por %p108, %p109
      %p111 = scmp.ne.s32.totalorder %s100, %s103
      %p112 = scmp.eq.s32.totalorder %s18, 1
      %p113 = por %p111, %p112
      %p114 = scmp.ne.s32.totalorder %s103, %s104
      %p115 = scmp.eq.s32.totalorder %s18, 0
      %p116 = por %p114, %p115
      %p117 = scmp.ne.s32.totalorder %s103, %s104
      %p118 = scmp.eq.s32.totalorder %s19, 1
      %p119 = por %p117, %p118
      %p121 = scmp.ne.s32.totalorder %s104, %s120
      %p122 = scmp.eq.s32.totalorder %s19, 0
      %p123 = por %p121, %p122
      %s124 = ssub.s32 %s20, %s39
      %s125 = ssub.s32 %s21, %s35
      %s126 = sor.u32 %s124, %s125
      %p127 = scmp.eq.s32.totalorder %s126, 0
      %s129 = sadd.s32 %s128, 1
      %s130 = scalar_select %p127, %s128, %s129
      %p133 = pneg %p127
      %p134 = scmp.eq.s32.totalorder %s13, 1
      %p135 = por %p133, %p134
      %p136 = scmp.ne.s32.totalorder %s128, %s131
      %p137 = scmp.eq.s32.totalorder %s13, 0
      %p138 = por %p136, %p137
      %p139 = scmp.ne.s32.totalorder %s128, %s131
      %p140 = scmp.eq.s32.totalorder %s18, 1
      %p141 = por %p139, %p140
      %p142 = scmp.ne.s32.totalorder %s131, %s132
      %p143 = scmp.eq.s32.totalorder %s18, 0
      %p144 = por %p142, %p143
      %p145 = scmp.ne.s32.totalorder %s131, %s132
      %p146 = scmp.eq.s32.totalorder %s19, 1
      %p147 = por %p145, %p146
      %p149 = scmp.ne.s32.totalorder %s132, %s148
      %p150 = scmp.eq.s32.totalorder %s19, 0
      %p151 = por %p149, %p150
      %s152 = ssub.s32 %s20, %s39
      %s153 = ssub.s32 %s21, %s35
      %s154 = sor.u32 %s152, %s153
      %p155 = scmp.eq.s32.totalorder %s154, 0
      %s157 = sadd.s32 %s156, 1
      %s158 = scalar_select %p155, %s156, %s157
      %p161 = pneg %p155
      %p162 = scmp.eq.s32.totalorder %s13, 1
      %p163 = por %p161, %p162
      %p164 = scmp.ne.s32.totalorder %s156, %s159
      %p165 = scmp.eq.s32.totalorder %s13, 0
      %p166 = por %p164, %p165
      %p167 = scmp.ne.s32.totalorder %s156, %s159
      %p168 = scmp.eq.s32.totalorder %s18, 1
      %p169 = por %p167, %p168
      %p170 = scmp.ne.s32.totalorder %s159, %s160
      %p171 = scmp.eq.s32.totalorder %s18, 0
      %p172 = por %p170, %p171
      %p173 = scmp.ne.s32.totalorder %s159, %s160
      %p174 = scmp.eq.s32.totalorder %s19, 1
      %p175 = por %p173, %p174
      %p177 = scmp.ne.s32.totalorder %s160, %s176
      %p178 = scmp.eq.s32.totalorder %s19, 0
      %p179 = por %p177, %p178
      %p180 = scmp.le.s32.totalorder 1, %s13
      %p181 = scmp.lt.s32.totalorder %s13, 3
      %p182 = pnand %p180, %p181
      %p183 = pneg %p182
      // Predicated region
      $region9: #{tpu_custom_call.1} parent=5 // pred_check
        _
      $region10: #{tpu_custom_call.1} parent=5 // pred_check_branch
        %185 = sbr.rel (%p182) target = $region12
      $region11: #{tpu_custom_call.1} parent=5 // pred_region
        %s186 = ssub.s32 %s13, 1
      $region12: #{tpu_custom_call.1} parent=5 // pred_fallthru
        _
      %p187 = scmp.lt.s32.totalorder %s13, 2
      // Predicated region
      $region13: #{tpu_custom_call.1} parent=5 // pred_check
        %p188 = pneg %p187
      $region14: #{tpu_custom_call.1} parent=5 // pred_check_branch
        %190 = sbr.rel (%p188) target = $region16
      $region15: #{tpu_custom_call.1} parent=5 // pred_region
        // Predicated region
        $region17: #{tpu_custom_call.1} parent=15 // pred_check
          %p191 = pneg %p54
        $region18: #{tpu_custom_call.1} parent=15 // pred_check_branch
          %193 = sbr.rel (%p191) target = $region20
        $region19: #{tpu_custom_call.1} parent=15 // pred_region
          %s194 = smul.u32 2, %s21
          %p195 = scmp.lt.s32.totalorder %s20, 1
          %s196 = scalar_select %p195, %s20, 1
          %p197 = scmp.lt.s32.totalorder %s194, 1
          %s198 = scalar_select %p197, %s194, 1
          %s199 = smul.addr %s196, 2
          %s200 = sadd.s32 %s198, %s199
          %s201 = smul.addr %s200, 8
          %s202 = scalar_lea.vmem %s0, %s201
          %s203 = smul.u32 2, %s21
        $region20: #{tpu_custom_call.1} parent=15 // pred_fallthru
          _
        // Predicated region
        $region21: #{tpu_custom_call.1} parent=15 // pred_check
          %p204 = pneg %p82
        $region22: #{tpu_custom_call.1} parent=15 // pred_check_branch
          %206 = sbr.rel (%p204) target = $region24
        $region23: #{tpu_custom_call.1} parent=15 // pred_region
          %p207 = scmp.lt.s32.totalorder %s20, 1
          %s208 = scalar_select %p207, %s20, 1
          %p209 = scmp.lt.s32.totalorder %s22, 0
          %s210 = scalar_select %p209, %s22, 0
          %s211 = sadd.s32 %s210, %s208
          %s212 = smul.addr %s211, 8
          %s213 = scalar_lea.vmem %s1, %s212
        $region24: #{tpu_custom_call.1} parent=15 // pred_fallthru
          _
        // Predicated region
        $region25: #{tpu_custom_call.1} parent=15 // pred_check
          %p214 = pneg %p110
        $region26: #{tpu_custom_call.1} parent=15 // pred_check_branch
          %216 = sbr.rel (%p214) target = $region28
        $region27: #{tpu_custom_call.1} parent=15 // pred_region
          %s217 = smul.u32 16, %s22
          %p218 = scmp.lt.s32.totalorder %s20, 1
          %s219 = scalar_select %p218, %s20, 1
          %p220 = scmp.lt.s32.totalorder %s217, 15
          %s221 = scalar_select %p220, %s217, 15
          %s222 = smul.addr %s219, 16
          %s223 = sadd.s32 %s221, %s222
          %s224 = smul.addr %s223, 4
          %s225 = scalar_lea.vmem %s2, %s224
          %s226 = smul.u32 16, %s22
        $region28: #{tpu_custom_call.1} parent=15 // pred_fallthru
          _
        // Predicated region
        $region29: #{tpu_custom_call.1} parent=15 // pred_check
          %p227 = pneg %p138
        $region30: #{tpu_custom_call.1} parent=15 // pred_check_branch
          %229 = sbr.rel (%p227) target = $region32
        $region31: #{tpu_custom_call.1} parent=15 // pred_region
          %s230 = smul.u32 2, %s21
          %p231 = scmp.lt.s32.totalorder %s20, 1
          %s232 = scalar_select %p231, %s20, 1
          %p233 = scmp.lt.s32.totalorder %s230, 1
          %s234 = scalar_select %p233, %s230, 1
          %s235 = smul.addr %s232, 2
          %s236 = sadd.s32 %s234, %s235
          %s237 = smul.addr %s236, 8
          %s238 = scalar_lea.vmem %s3, %s237
          %s239 = smul.u32 2, %s21
        $region32: #{tpu_custom_call.1} parent=15 // pred_fallthru
          _
      $region16: #{tpu_custom_call.1} parent=5 // pred_fallthru
        _
      %p240 = scmp.le.s32.totalorder 1, %s13
      %p241 = scmp.lt.s32.totalorder %s13, 3
      %p242 = pnand %p240, %p241
      %p243 = pneg %p242
      // Predicated region
      $region33: #{tpu_custom_call.1} parent=5 // pred_check
        _
      $region34: #{tpu_custom_call.1} parent=5 // pred_check_branch
        %245 = sbr.rel (%p242) target = $region36
      $region35: #{tpu_custom_call.1} parent=5 // pred_region
        %s246 = ssub.s32 %s13, 1
        %s247 = smul.u32 2, %s24
        %p248 = scmp.lt.s32.totalorder %s23, 1
        %s249 = scalar_select %p248, %s23, 1
        %p250 = scmp.lt.s32.totalorder %s247, 1
        %s251 = scalar_select %p250, %s247, 1
        %s252 = smul.addr %s249, 2
        %s253 = sadd.s32 %s251, %s252
        %s254 = smul.addr %s253, 8
        %s255 = scalar_lea.vmem %s0, %s254
        %p256 = pneg %p60
        %p257 = pneg %p57
        %p258 = scmp.lt.s32.totalorder %s23, 1
        %s259 = scalar_select %p258, %s23, 1
        %p260 = scmp.lt.s32.totalorder %s25, 0
        %s261 = scalar_select %p260, %s25, 0
        %s262 = sadd.s32 %s261, %s259
        %s263 = smul.addr %s262, 8
        %s264 = scalar_lea.vmem %s1, %s263
        %p265 = pneg %p88
        %p266 = pneg %p85
        %s267 = smul.u32 16, %s25
        %p268 = scmp.lt.s32.totalorder %s23, 1
        %s269 = scalar_select %p268, %s23, 1
        %p270 = scmp.lt.s32.totalorder %s267, 15
        %s271 = scalar_select %p270, %s267, 15
        %s272 = smul.addr %s269, 16
        %s273 = sadd.s32 %s271, %s272
        %s274 = smul.addr %s273, 4
        %s275 = scalar_lea.vmem %s2, %s274
        %p276 = pneg %p116
        %p277 = pneg %p113
        %s278 = smul.u32 2, %s24
        %p279 = scmp.lt.s32.totalorder %s23, 1
        %s280 = scalar_select %p279, %s23, 1
        %p281 = scmp.lt.s32.totalorder %s278, 1
        %s282 = scalar_select %p281, %s278, 1
        %s283 = smul.addr %s280, 2
        %s284 = sadd.s32 %s282, %s283
        %s285 = smul.addr %s284, 8
        %s286 = scalar_lea.vmem %s3, %s285
        %p287 = pneg %p144
        %p288 = pneg %p141
        %p289 = pneg %p172
        %p290 = pneg %p169
        %s291 = sand.u32 %s159, 1
        %s292 = scalar_lea.sflag [#allocation3], %s291
        %s293 = sand.u32 %s159, 1
        %s294 = smul.addr %s293, 16
        %s295 = scalar_lea.vmem [#allocation2], %s294
        %s296 = smul.u32 2, %s24
        %p297 = scmp.lt.s32.totalorder %s23, 1
        %s298 = scalar_select %p297, %s23, 1
        %p299 = scmp.lt.s32.totalorder %s296, 1
        %s300 = scalar_select %p299, %s296, 1
        %s301 = smul.addr %s298, 2
        %s302 = sadd.s32 %s300, %s301
        %s303 = smul.addr %s302, 8
        %s304 = scalar_lea.vmem %s0, %s303
        %s305 = smul.u32 2, %s24
        %p306 = scmp.lt.s32.totalorder %s23, 1
        %s307 = scalar_select %p306, %s23, 1
        %p308 = scmp.lt.s32.totalorder %s25, 0
        %s309 = scalar_select %p308, %s25, 0
        %s310 = sadd.s32 %s309, %s307
        %s311 = smul.addr %s310, 8
        %s312 = scalar_lea.vmem %s1, %s311
        %s313 = smul.u32 16, %s25
        %p314 = scmp.lt.s32.totalorder %s23, 1
        %s315 = scalar_select %p314, %s23, 1
        %p316 = scmp.lt.s32.totalorder %s313, 15
        %s317 = scalar_select %p316, %s313, 15
        %s318 = smul.addr %s315, 16
        %s319 = sadd.s32 %s317, %s318
        %s320 = smul.addr %s319, 4
        %s321 = scalar_lea.vmem %s2, %s320
        %s322 = smul.u32 16, %s25
        %s323 = smul.u32 2, %s24
        %p324 = scmp.lt.s32.totalorder %s23, 1
        %s325 = scalar_select %p324, %s23, 1
        %p326 = scmp.lt.s32.totalorder %s323, 1
        %s327 = scalar_select %p326, %s323, 1
        %s328 = smul.addr %s325, 2
        %s329 = sadd.s32 %s327, %s328
        %s330 = smul.addr %s329, 8
        %s331 = scalar_lea.vmem %s3, %s330
        %s332 = smul.u32 2, %s24
        %s333 = smul.u32 2, %s24
        %v335 = vld [vmem:[%s304] sm:$0xff]
        %v336 = vld [vmem:[%s304 + $0x8] sm:$0xff]
        %v337 = vld [vmem:[%s312] sm:$0xff]
        %vm338 = vcmask 64512
        %v340 = vsel %vm338, %v335, 0
        %v343 = vsel %vm338, %v336, 0
        %345 = vmatprep.subr.mxu0 0.0
        %346 = vmatpush1.msra.mxu0 0.0
        %347 = vmatprep.subr.mxu0 0.0
        %348 = vmatpush1.msra.mxu0 0.0
        %349 = vmatprep.subr.mxu0 0.0
        %350 = vmatpush1.msra.mxu0 0.0
        %351 = vmatprep.subr.mxu0 0.0
        %352 = vmatpush1.msra.mxu0 0.0
        %353 = vmatprep.subr.mxu0 0.0
        %354 = vmatpush1.msra.mxu0 0.0
        %355 = vmatprep.subr.mxu0 0.0
        %356 = vmatpush1.msra.mxu0 0.0
        %357 = vmatprep.subr.mxu0 0.0
        %358 = vmatpush1.msra.mxu0 0.0
        %359 = vmatprep.subr.mxu0 0.0
        %360 = vmatpush1.msra.mxu0 0.0
        %361 = vmatprep.subr.mxu0 0.0
        %362 = vmatpush1.msra.mxu0 0.0
        %363 = vmatprep.subr.mxu0 0.0
        %364 = vmatpush1.msra.mxu0 0.0
        %365 = vmatprep.subr.mxu0 0.0
        %366 = vmatpush1.msra.mxu0 0.0
        %367 = vmatprep.subr.mxu0 0.0
        %368 = vmatpush1.msra.mxu0 0.0
        %369 = vmatprep.subr.mxu0 0.0
        %370 = vmatpush1.msra.mxu0 0.0
        %371 = vmatprep.subr.mxu0 0.0
        %372 = vmatpush1.msra.mxu0 0.0
        %373 = vmatprep.subr.mxu0 0.0
        %374 = vmatpush1.msra.mxu0 0.0
        %375 = vmatprep.subr.mxu0 0.0
        %376 = vmatpush1.msra.mxu0 %v337
        %377 = vmatprep.subr.mxu0 0.0
        %378 = vmatpush2.msra.mxu0 0.0
        %379 = vmatprep.subr.mxu0 0.0
        %380 = vmatpush2.msra.mxu0 0.0
        %381 = vmatprep.subr.mxu0 0.0
        %382 = vmatpush2.msra.mxu0 0.0
        %383 = vmatprep.subr.mxu0 0.0
        %384 = vmatpush2.msra.mxu0 0.0
        %385 = vmatprep.subr.mxu0 0.0
        %386 = vmatpush2.msra.mxu0 0.0
        %387 = vmatprep.subr.mxu0 0.0
        %388 = vmatpush2.msra.mxu0 0.0
        %389 = vmatprep.subr.mxu0 0.0
        %390 = vmatpush2.msra.mxu0 0.0
        %391 = vmatprep.subr.mxu0 0.0
        %392 = vmatpush2.msra.mxu0 0.0
        %393 = vmatprep.subr.mxu0 0.0
        %394 = vmatpush2.msra.mxu0 0.0
        %395 = vmatprep.subr.mxu0 0.0
        %396 = vmatpush2.msra.mxu0 0.0
        %397 = vmatprep.subr.mxu0 0.0
        %398 = vmatpush2.msra.mxu0 0.0
        %399 = vmatprep.subr.mxu0 0.0
        %400 = vmatpush2.msra.mxu0 0.0
        %401 = vmatprep.subr.mxu0 0.0
        %402 = vmatpush2.msra.mxu0 0.0
        %403 = vmatprep.subr.mxu0 0.0
        %404 = vmatpush2.msra.mxu0 0.0
        %405 = vmatprep.subr.mxu0 0.0
        %406 = vmatpush2.msra.mxu0 0.0
        %407 = vmatprep.subr.mxu0 0.0
        %408 = vmatpush2.msra.mxu0 0.0
        %409 = vmatprep.mubr.f32.mxu0 0.0
        %410 = vmatmul.mubr.f32.gmra.mxu0 %v340
        %v411 = vpop.f32.mrf.mxu0
        %v412 = vadd.f32 0.0, %v411
        %v413 = vpop.f32.mrf.mxu0
        %414 = vmatprep.mubr.f32.mxu0 0.0
        %415 = vmatmul.mubr.f32.gmra.mxu0 %v343
        %v416 = vpop.f32.mrf.mxu0
        %v417 = vadd.f32 0.0, %v416
        %v418 = vpop.f32.mrf.mxu0
        %419 = vdwg.mxu0
        %v420 = vmul.f32 %v412, 1.442695
        %v421 = vpow.pop %v420
        %v422 = vmul.f32 %v417, 1.442695
        %v423 = vpow.pop %v422
        %v424 = vpack.c.bf16 %v423, %v421
        %v425 = vld [vmem:[%s321] sm:$0xf]
        %v426 = vld [vmem:[%s321 + $0x4] sm:$0xf]
        %v427 = vld [vmem:[%s321 + $0x8] sm:$0xf]
        %v428 = vld [vmem:[%s321 + $0xc] sm:$0xf]
        %v429 = vld [vmem:[%s321 + $0x10] sm:$0xf]
        %v430 = vld [vmem:[%s321 + $0x14] sm:$0xf]
        %v431 = vld [vmem:[%s321 + $0x18] sm:$0xf]
        %v432 = vld [vmem:[%s321 + $0x1c] sm:$0xf]
        %v433 = vld [vmem:[%s321 + $0x20] sm:$0xf]
        %v434 = vld [vmem:[%s321 + $0x24] sm:$0xf]
        %v435 = vld [vmem:[%s321 + $0x28] sm:$0xf]
        %v436 = vld [vmem:[%s321 + $0x2c] sm:$0xf]
        %v437 = vld [vmem:[%s321 + $0x30] sm:$0xf]
        %v438 = vld [vmem:[%s321 + $0x34] sm:$0xf]
        %v439 = vld [vmem:[%s321 + $0x38] sm:$0xf]
        %v440 = vld [vmem:[%s321 + $0x3c] sm:$0xf]
        %v457 = vunpack.c.l.b16 %v425
        %v458 = vunpack.c.l.b16 %v426
        %v459 = vunpack.c.l.b16 %v427
        %v460 = vunpack.c.l.b16 %v428
        %v461 = vunpack.c.l.b16 %v429
        %v462 = vunpack.c.l.b16 %v430
        %v463 = vunpack.c.l.b16 %v431
        %v464 = vunpack.c.l.b16 %v432
        %v465 = vunpack.c.l.b16 %v433
        %v466 = vunpack.c.l.b16 %v434
        %v467 = vunpack.c.l.b16 %v435
        %v468 = vunpack.c.l.b16 %v436
        %v469 = vunpack.c.l.b16 %v437
        %v470 = vunpack.c.l.b16 %v438
        %v471 = vunpack.c.l.b16 %v439
        %v472 = vunpack.c.l.b16 %v440
        %v473 = vpack.c.b16 %v458, %v457
        %v474 = vpack.c.b16 %v460, %v459
        %v475 = vpack.c.b16 %v462, %v461
        %v476 = vpack.c.b16 %v464, %v463
        %v477 = vpack.c.b16 %v466, %v465
        %v478 = vpack.c.b16 %v468, %v467
        %v479 = vpack.c.b16 %v470, %v469
        %v480 = vpack.c.b16 %v472, %v471
        %489 = vmatprep.subr.bf16.mxu0 0
        %490 = vmatpush1.bf16.msra.mxu0 %v480
        %491 = vmatprep.subr.bf16.mxu0 0
        %492 = vmatpush1.bf16.msra.mxu0 %v479
        %493 = vmatprep.subr.bf16.mxu0 0
        %494 = vmatpush1.bf16.msra.mxu0 %v478
        %495 = vmatprep.subr.bf16.mxu0 0
        %496 = vmatpush1.bf16.msra.mxu0 %v477
        %497 = vmatprep.subr.bf16.mxu0 0
        %498 = vmatpush1.bf16.msra.mxu0 %v476
        %499 = vmatprep.subr.bf16.mxu0 0
        %500 = vmatpush1.bf16.msra.mxu0 %v475
        %501 = vmatprep.subr.bf16.mxu0 0
        %502 = vmatpush1.bf16.msra.mxu0 %v474
        %503 = vmatprep.subr.bf16.mxu0 0
        %504 = vmatpush1.bf16.msra.mxu0 %v473
        %505 = vmatprep.subr.bf16.mxu0 0
        %506 = vmatpush2.bf16.msra.mxu0 0
        %507 = vmatprep.subr.bf16.mxu0 0
        %508 = vmatpush2.bf16.msra.mxu0 0
        %509 = vmatprep.subr.bf16.mxu0 0
        %510 = vmatpush2.bf16.msra.mxu0 0
        %511 = vmatprep.subr.bf16.mxu0 0
        %512 = vmatpush2.bf16.msra.mxu0 0
        %513 = vmatprep.subr.bf16.mxu0 0
        %514 = vmatpush2.bf16.msra.mxu0 0
        %515 = vmatprep.subr.bf16.mxu0 0
        %516 = vmatpush2.bf16.msra.mxu0 0
        %517 = vmatprep.subr.bf16.mxu0 0
        %518 = vmatpush2.bf16.msra.mxu0 0
        %519 = vmatprep.subr.bf16.mxu0 0
        %520 = vmatpush2.bf16.msra.mxu0 0
        %521 = vmatprep.mubr.bf16.mxu0 0
        %522 = vmatmul.mubr.bf16.gmra.mxu0 %v424
        %v523 = vpop.f32.mrf.mxu0
        %v524 = vadd.f32 0.0, %v523
        %v525 = vpop.f32.mrf.mxu0
        %v526 = vpop.f32.mrf.mxu0
        %v527 = vadd.f32 0.0, %v526
        %v528 = vpop.f32.mrf.mxu0
        %529 = vdwg.mxu0
        %p530 = scmp.eq.s32.totalorder %s25, 0
        // Predicated region
        $region37: #{tpu_custom_call.1} parent=35 // pred_check
          %p531 = pneg %p530
        $region38: #{tpu_custom_call.1} parent=35 // pred_check_branch
          %533 = sbr.rel (%p531) target = $region40
        $region39: #{tpu_custom_call.1} parent=35 // pred_region
          %v534 = vld [vmem:[%s331] sm:$0xff]
          %v535 = vld [vmem:[%s331 + $0x8] sm:$0xff]
          %vm536 = vcmask 261120
          %537 = vst.msk [vmem:[%s295] sm:$0xff] %vm536, %v534
          %538 = vst.msk [vmem:[%s295 + $0x8] sm:$0xff] %vm536, %v535
        $region40: #{tpu_custom_call.1} parent=35 // pred_fallthru
          _
        %v539 = vld [vmem:[%s295] sm:$0xff]
        %v540 = vld [vmem:[%s295 + $0x8] sm:$0xff]
        %v541 = vadd.f32 %v539, %v524
        %v542 = vadd.f32 %v540, %v527
        %vm543 = vcmask 261120
        %544 = vst.msk [vmem:[%s295] sm:$0xff] %vm543, %v541
        %545 = vst.msk [vmem:[%s295 + $0x8] sm:$0xff] %vm543, %v542
        %s546 = sand.u32 %s159, 1
        %s547 = scalar_lea.sflag [#allocation3], %s546
        %s548 = sand.u32 %s159, 1
        %s549 = smul.addr %s548, 16
        %s550 = scalar_lea.vmem [#allocation2], %s549
        // Predicated region
        $region41: #{tpu_custom_call.1} parent=35 // pred_check
          %p551 = pneg %p169
        $region42: #{tpu_custom_call.1} parent=35 // pred_check_branch
          %553 = sbr.rel (%p551) target = $region44
        $region43: #{tpu_custom_call.1} parent=35 // pred_region
          %s554 = smul.u32 2, %s24
          %s556 = ssub.s32 256, 256
          %557 = vsyncadd %s547, %s556
          %s558 = smul.addr %s23, 2
          %s559 = sadd.s32 %s554, %s558
          %s560 = smul.addr %s559, 128
          %s561 = scalar_lea.hbm %s4, %s560
          %s562 = sshll.u32 %s550, 4
          %s563 = int_to_ptr.vmem [resolvable:$true] %s562
          %568 = dma.vmem_to_hbm [thread:$0]  %s563, 256, %s561, %s547, 128, 128, 8
        $region44: #{tpu_custom_call.1} parent=35 // pred_fallthru
          _
      $region36: #{tpu_custom_call.1} parent=5 // pred_fallthru
        _
      %p569 = scmp.le.s32.totalorder 2, %s13
      // Predicated region
      $region45: #{tpu_custom_call.1} parent=5 // pred_check
        %p570 = pneg %p569
      $region46: #{tpu_custom_call.1} parent=5 // pred_check_branch
        %572 = sbr.rel (%p570) target = $region48
      $region47: #{tpu_custom_call.1} parent=5 // pred_region
        %s573 = ssub.s32 %s13, 2
        // Predicated region
        $region49: #{tpu_custom_call.1} parent=47 // pred_check
          %p574 = pneg %p175
        $region50: #{tpu_custom_call.1} parent=47 // pred_check_branch
          %576 = sbr.rel (%p574) target = $region52
        $region51: #{tpu_custom_call.1} parent=47 // pred_region
          %s577 = sand.u32 %s160, 1
          %s578 = scalar_lea.sflag [#allocation3], %s577
          %s579 = sand.u32 %s160, 1
          %s580 = smul.addr %s579, 16
          %s581 = scalar_lea.vmem [#allocation2], %s580
          %582 = dma.done %s578, 256
        $region52: #{tpu_custom_call.1} parent=47 // pred_fallthru
          _
      $region48: #{tpu_custom_call.1} parent=5 // pred_fallthru
        _
    $region6: #{tpu_custom_call.1} parent=1 // loop_footer
      %s17 = sadd.s32 1, %s13
    $region7: #{tpu_custom_call.1} parent=1 // loop_footer_branch
      %12 = sbr.rel target = $region3
    $region8: #{tpu_custom_call.1} parent=1 // loop_exit
      _
    %583 = vsyncpa [#allocation3], 1
    %s584 = scalar_lea.sflag [#allocation3], 1
    %585 = vsyncpa %s584, 1

</llo_original>
